<compile_context>
chip_gen: v5e
topology: v5e:2x2
jax: 0.10.0
libtpu: 0.0.40
codegen_flags: <defaults>
</compile_context>

<pallas_src>
import functools

import jax
import jax.numpy as jnp
from jax.experimental import pallas as pl
from jax.experimental.pallas import tpu as pltpu

LANES = 128
SUBLANES = 8
_CHUNK_ROWS = 512          # in-kernel chunk (multiple of 32 -> dtype safe)


def _round_up(x, m):
    return ((x + m - 1) // m) * m


def _num_partials_default():
    """2 independent partials on multi-TensorCore chips, else 1."""
    try:
        kind = jax.devices()[0].device_kind.lower()
    except Exception:
        return 1
    return 2 if any(tag in kind for tag in ("v4", "v5p", "v7")) else 1


def _bce_partial_kernel(x_ref, t_ref, out_ref, acc_ref, *,
                        pos_weight, epsilon, n_rows, chunk, may_need_mask):
    c = pl.program_id(0)            # per-core partial index ("parallel")
    i = pl.program_id(1)            # row-tile index ("arbitrary" reduction)
    steps = pl.num_programs(1)

    rows_tile = x_ref.shape[0]      # static block row count
    n_full = rows_tile // chunk     # static
    tail_rows = rows_tile - n_full * chunk   # static; only in single-tile case
    assert not (may_need_mask and tail_rows), "ragged chunk only in exact tile"

    @pl.when(i == 0)
    def _init():
        acc_ref[...] = jnp.zeros_like(acc_ref)

    def chunk_loss(r0, nr):
        # Native-dtype VMEM reads; math in f32 on the VPU/EUP.
        x = x_ref[pl.ds(r0, nr), :].astype(jnp.float32)
        t = t_ref[pl.ds(r0, nr), :].astype(jnp.float32)
        # TODO(synk): on v7x with bf16 inputs the two logs could run in bf16 on
        # the EUP to halve transcendental pressure; kept f32 to match reference.
        return (-pos_weight * t * jnp.log(x + epsilon)
                - (1.0 - t) * jnp.log(1.0 - x + epsilon))

    def reduce8(v):
        # Layout-preserving sublane tree-add: (m*8,128) -> (8,128), pure VPU.
        m = v.shape[0] // SUBLANES
        return v.reshape(m, SUBLANES, LANES).sum(axis=0)

    def accumulate_unmasked():
        for k in range(n_full):
            acc_ref[...] += reduce8(chunk_loss(k * chunk, chunk))
        if tail_rows:   # ragged remainder of an exact (full-array) tile
            acc_ref[0:1, :] += jnp.sum(
                chunk_loss(n_full * chunk, tail_rows), axis=0, keepdims=True)

    if not may_need_mask:
        # Every row of every block is valid data: pure hot path, no masking.
        accumulate_unmasked()
    else:
        tile_start = (c * steps + i) * rows_tile     # global start row
        needs_mask = tile_start + rows_tile > n_rows

        @pl.when(jnp.logical_not(needs_mask))
        def _fast():
            accumulate_unmasked()

        @pl.when(needs_mask)
        def _masked():
            # Only tiles containing garbage-padded / duplicated rows pay for
            # the iota mask.  Select (not multiply) so NaN/Inf from garbage
            # input rows is discarded.
            ridx = jax.lax.broadcasted_iota(jnp.int32, (chunk, LANES), 0)
            for k in range(n_full):
                lim = n_rows - tile_start - k * chunk
                loss = chunk_loss(k * chunk, chunk)
                acc_ref[...] += reduce8(jnp.where(ridx < lim, loss, 0.0))

    @pl.when(i == steps - 1)
    def _finalize():
        out_ref[...] = acc_ref[...][None]


def set_criterion_pr(logits, target, *, pos_weight=1.0, reduction="mean",
                     epsilon=1e-6, tile_rows=8192, num_partials=None):
    """Pallas TPU implementation of SetCriterion_PR.forward (mean/sum)."""
    assert logits.shape == target.shape
    # TODO(synk): reduction='none' (elementwise output) is not implemented in
    # this reducing kernel; only 'mean' and 'sum' are supported.
    assert reduction in ("mean", "sum")

    n = int(logits.size)
    if n == 0:
        return jnp.float32(0.0)

    pos_weight = float(pos_weight)
    epsilon = float(epsilon)
    if num_partials is None:
        num_partials = _num_partials_default()

    flat_l = jnp.ravel(logits)
    flat_t = jnp.ravel(target)

    rem = n % LANES                 # lane tail (< 128 elements)
    n_bulk = n - rem
    rows = n_bulk // LANES          # full 128-wide rows handled by the kernel

    total = jnp.float32(0.0)

    if rows > 0:
        tile_rows = max(_CHUNK_ROWS, (int(tile_rows) // _CHUNK_ROWS) * _CHUNK_ROWS)
        if rows <= tile_rows:
            tile_rows_eff = rows            # block == full dim: always legal
            total_tiles = 1
        else:
            tile_rows_eff = tile_rows       # multiple of 512 (<= rows)
            total_tiles = pl.cdiv(rows, tile_rows_eff)

        if total_tiles < num_partials:
            num_partials = 1
        tiles_per_core = pl.cdiv(total_tiles, num_partials)
        may_need_mask = num_partials * tiles_per_core * tile_rows_eff > rows
        chunk = min(_CHUNK_ROWS,
                    max(SUBLANES, (tile_rows_eff // SUBLANES) * SUBLANES))

        # Zero-copy when n is lane aligned (the common case): ravel+reshape is
        # a bitcast.  Only a non-128-divisible n pays for the prefix slice.
        if rem == 0:
            bulk_l, bulk_t = flat_l, flat_t
        else:
            # TODO(synk): this prefix slice materializes a copy of the bulk;
            # unavoidable without manual 1-D HBM DMA when n % 128 != 0.
            bulk_l = jax.lax.slice(flat_l, (0,), (n_bulk,))
            bulk_t = jax.lax.slice(flat_t, (0,), (n_bulk,))
        bulk_l = bulk_l.reshape(rows, LANES)
        bulk_t = bulk_t.reshape(rows, LANES)

        kernel = functools.partial(
            _bce_partial_kernel, pos_weight=pos_weight, epsilon=epsilon,
            n_rows=rows, chunk=chunk, may_need_mask=may_need_mask)

        def in_map(c, i):
            # Clamp so a rounded-up grid never asks for a fully out-of-range
            # block; the in-kernel row mask zeroes any duplicated tail tile.
            return (jnp.minimum(c * tiles_per_core + i, total_tiles - 1), 0)

        in_buf_bytes = 2 * tile_rows_eff * LANES * (
            bulk_l.dtype.itemsize + bulk_t.dtype.itemsize)
        vmem_limit = int(min(max(2 * in_buf_bytes, 32 << 20), 48 << 20))

        bytes_accessed = (bulk_l.size * bulk_l.dtype.itemsize
                          + bulk_t.size * bulk_t.dtype.itemsize
                          + num_partials * SUBLANES * LANES * 4)
        cost = pl.CostEstimate(flops=8 * n_bulk, transcendentals=2 * n_bulk,
                               bytes_accessed=bytes_accessed)

        partials = pl.pallas_call(
            kernel,
            out_shape=jax.ShapeDtypeStruct((num_partials, SUBLANES, LANES),
                                           jnp.float32),
            grid_spec=pltpu.PrefetchScalarGridSpec(
                num_scalar_prefetch=0,
                grid=(num_partials, tiles_per_core),
                in_specs=[
                    pl.BlockSpec((tile_rows_eff, LANES), in_map),
                    pl.BlockSpec((tile_rows_eff, LANES), in_map),
                ],
                out_specs=pl.BlockSpec((1, SUBLANES, LANES),
                                       lambda c, i: (c, 0, 0)),
                scratch_shapes=[pltpu.VMEM((SUBLANES, LANES), jnp.float32)],
            ),
            compiler_params=pltpu.CompilerParams(
                dimension_semantics=("parallel", "arbitrary"),
                vmem_limit_bytes=vmem_limit),
            cost_estimate=cost,
        )(bulk_l, bulk_t)

        total = total + jnp.sum(partials)

    if rem:
        # < 128 leftover elements: plain JAX, negligible.
        tail_l = flat_l[n_bulk:].astype(jnp.float32)
        tail_t = flat_t[n_bulk:].astype(jnp.float32)
        total = total + jnp.sum(
            -pos_weight * tail_t * jnp.log(tail_l + epsilon)
            - (1.0 - tail_t) * jnp.log(1.0 - tail_l + epsilon))

    if reduction == "mean":
        total = total / jnp.float32(n)
    return total


def _reference(logits, target, pos_weight=1.0, reduction="mean", epsilon=1e-6):
    logits = logits.astype(jnp.float32)
    target = target.astype(jnp.float32)
    loss = (-pos_weight * target * jnp.log(logits + epsilon)
            - (1.0 - target) * jnp.log(1.0 - logits + epsilon))
    return loss.mean() if reduction == "mean" else loss.sum()


if __name__ == "__main__":
    key = jax.random.PRNGKey(0)
    k1, k2, k3, k4, k5, k6 = jax.random.split(key, 6)

    # Case 1: dense-prediction head shape (B, C, H, W), lane-aligned element
    # count -> zero-copy staging path.
    shape1 = (2, 4, 16, 16)
    l1 = jax.nn.sigmoid(jax.random.normal(k1, shape1, jnp.float32))
    t1 = (jax.random.uniform(k2, shape1) > 0.5).astype(jnp.float32)
    f1 = jax.jit(functools.partial(set_criterion_pr, pos_weight=1.0,
                                   reduction="mean"))
    o1 = jax.block_until_ready(f1(l1, t1))
    r1 = _reference(l1, t1, 1.0, "mean")
    assert jnp.allclose(o1, r1, rtol=1e-5, atol=1e-6), (o1, r1)

    # Case 2: non-lane-aligned size (in-tile ragged rows + plain-JAX lane
    # tail) with 'sum' reduction and pos_weight != 1.
    shape2 = (3, 5, 7, 11)
    l2 = jax.nn.sigmoid(jax.random.normal(k3, shape2, jnp.float32))
    t2 = (jax.random.uniform(k4, shape2) > 0.5).astype(jnp.float32)
    f2 = jax.jit(functools.partial(set_criterion_pr, pos_weight=2.0,
                                   reduction="sum"))
    o2 = jax.block_until_ready(f2(l2, t2))
    r2 = _reference(l2, t2, 2.0, "sum")
    assert jnp.allclose(o2, r2, rtol=1e-5, atol=1e-5), (o2, r2)

    # Case 3: multi-tile grid with two partials, a clamped duplicate tile and
    # the masked-edge path (small tile_rows forced so it runs on tiny data).
    shape3 = (3, 4, 128, 128)
    l3 = jax.nn.sigmoid(jax.random.normal(k5, shape3, jnp.float32))
    t3 = (jax.random.uniform(k6, shape3) > 0.5).astype(jnp.float32)
    f3 = jax.jit(functools.partial(set_criterion_pr, pos_weight=1.5,
                                   reduction="mean", tile_rows=512,
                                   num_partials=2))
    o3 = jax.block_until_ready(f3(l3, t3))
    r3 = _reference(l3, t3, 1.5, "mean")
    assert jnp.allclose(o3, r3, rtol=1e-4, atol=1e-5), (o3, r3)

    print("KERNEL_OK")
</pallas_src>

<mosaic_0001>
module attributes {stable_mosaic.version = 11 : i64} {
  func.func @_bce_partial_kernel(%arg0: i32, %arg1: i32, %arg2: memref<16x128xf32, #tpu.memory_space<vmem>>, %arg3: memref<16x128xf32, #tpu.memory_space<vmem>>, %arg4: memref<1x8x128xf32, #tpu.memory_space<vmem>>, %arg5: memref<8x128xf32, #tpu.memory_space<vmem>>) attributes {dimension_semantics = [#tpu.dimension_semantics<parallel>, #tpu.dimension_semantics<arbitrary>], iteration_bounds = array<i64: 1, 1>, scalar_prefetch = 0 : i64, scratch_operands = 1 : i64, tpu.core_type = #tpu.core_type<tc>, window_params = [{transform_indices = @transform_0, window_bounds = array<i64: 16, 128>}, {transform_indices = @transform_1, window_bounds = array<i64: 16, 128>}, {transform_indices = @transform_2, window_bounds = array<i64: 1, 8, 128>}]} {
    %c0_i32 = arith.constant 0 : i32
    %0 = arith.cmpi eq, %arg1, %c0_i32 : i32
    %1 = arith.extui %0 : i1 to i32
    %c0_i32_0 = arith.constant 0 : i32
    %2 = arith.cmpi ne, %1, %c0_i32_0 : i32
    scf.if %2 {
      %cst_15 = arith.constant 0.000000e+00 : f32
      %28 = vector.broadcast %cst_15 : f32 to vector<8x128xf32>
      %c0_16 = arith.constant 0 : index
      %c0_17 = arith.constant 0 : index
      %29 = vector.load %arg5[%c0_16, %c0_17] : memref<8x128xf32, #tpu.memory_space<vmem>>, vector<8x128xf32>
      tpu.vector_store %arg5[%c0_16, %c0_17], %28 {strides = array<i32>} : memref<8x128xf32, #tpu.memory_space<vmem>>, vector<8x128xf32>,
    } else {
    }
    %c0 = arith.constant 0 : index
    %c0_1 = arith.constant 0 : index
    %3 = vector.load %arg5[%c0, %c0_1] : memref<8x128xf32, #tpu.memory_space<vmem>>, vector<8x128xf32>
    %c0_2 = arith.constant 0 : index
    %c0_3 = arith.constant 0 : index
    %4 = vector.load %arg2[%c0_2, %c0_3] : memref<16x128xf32, #tpu.memory_space<vmem>>, vector<16x128xf32>
    %c0_4 = arith.constant 0 : index
    %c0_5 = arith.constant 0 : index
    %5 = vector.load %arg3[%c0_4, %c0_5] : memref<16x128xf32, #tpu.memory_space<vmem>>, vector<16x128xf32>
    %cst = arith.constant -1.000000e+00 : f32
    %6 = vector.broadcast %cst : f32 to vector<16x128xf32>
    %7 = arith.mulf %6, %5 : vector<16x128xf32>
    %cst_6 = arith.constant 9.99999997E-7 : f32
    %8 = vector.broadcast %cst_6 : f32 to vector<16x128xf32>
    %9 = arith.addf %4, %8 : vector<16x128xf32>
    %10 = math.log %9 : vector<16x128xf32>
    %11 = arith.mulf %7, %10 : vector<16x128xf32>
    %cst_7 = arith.constant 1.000000e+00 : f32
    %12 = vector.broadcast %cst_7 : f32 to vector<16x128xf32>
    %13 = arith.subf %12, %5 : vector<16x128xf32>
    %cst_8 = arith.constant 1.000000e+00 : f32
    %14 = vector.broadcast %cst_8 : f32 to vector<16x128xf32>
    %15 = arith.subf %14, %4 : vector<16x128xf32>
    %cst_9 = arith.constant 9.99999997E-7 : f32
    %16 = vector.broadcast %cst_9 : f32 to vector<16x128xf32>
    %17 = arith.addf %15, %16 : vector<16x128xf32>
    %18 = math.log %17 : vector<16x128xf32>
    %19 = arith.mulf %13, %18 : vector<16x128xf32>
    %20 = arith.subf %11, %19 : vector<16x128xf32>
    %21 = vector.shape_cast %20 : vector<16x128xf32> to vector<2x8x128xf32>
    %cst_10 = arith.constant dense<0.000000e+00> : vector<8x128xf32>
    %22 = vector.multi_reduction <add>, %21, %cst_10 [0] : vector<2x8x128xf32> to vector<8x128xf32>
    %23 = arith.addf %3, %22 : vector<8x128xf32>
    %c0_11 = arith.constant 0 : index
    %c0_12 = arith.constant 0 : index
    %24 = vector.load %arg5[%c0_11, %c0_12] : memref<8x128xf32, #tpu.memory_space<vmem>>, vector<8x128xf32>
    tpu.vector_store %arg5[%c0_11, %c0_12], %23 {strides = array<i32>} : memref<8x128xf32, #tpu.memory_space<vmem>>, vector<8x128xf32>,
    %c0_i32_13 = arith.constant 0 : i32
    %25 = arith.cmpi eq, %arg1, %c0_i32_13 : i32
    %26 = arith.extui %25 : i1 to i32
    %c0_i32_14 = arith.constant 0 : i32
    %27 = arith.cmpi ne, %26, %c0_i32_14 : i32
    scf.if %27 {
      %c0_15 = arith.constant 0 : index
      %c0_16 = arith.constant 0 : index
      %28 = vector.load %arg5[%c0_15, %c0_16] : memref<8x128xf32, #tpu.memory_space<vmem>>, vector<8x128xf32>
      %29 = vector.shape_cast %28 : vector<8x128xf32> to vector<1x8x128xf32>
      %c0_17 = arith.constant 0 : index
      %c0_18 = arith.constant 0 : index
      %c0_19 = arith.constant 0 : index
      %30 = vector.load %arg4[%c0_17, %c0_18, %c0_19] : memref<1x8x128xf32, #tpu.memory_space<vmem>>, vector<1x8x128xf32>
      tpu.vector_store %arg4[%c0_17, %c0_18, %c0_19], %29 {strides = array<i32>} : memref<1x8x128xf32, #tpu.memory_space<vmem>>, vector<1x8x128xf32>,
    } else {
    }
    return
  }
  func.func @transform_0(%arg0: i32, %arg1: i32) -> (i32, i32) {
    %c1_i32 = arith.constant 1 : i32
    %0 = arith.muli %arg0, %c1_i32 : i32
    %1 = arith.addi %0, %arg1 : i32
    %c0_i32 = arith.constant 0 : i32
    %2 = arith.minsi %1, %c0_i32 : i32
    %c0_i32_0 = arith.constant 0 : i32
    %c0_i32_1 = arith.constant 0 : i32
    return %2, %c0_i32_0 : i32, i32
  }
  func.func @transform_1(%arg0: i32, %arg1: i32) -> (i32, i32) {
    %c1_i32 = arith.constant 1 : i32
    %0 = arith.muli %arg0, %c1_i32 : i32
    %1 = arith.addi %0, %arg1 : i32
    %c0_i32 = arith.constant 0 : i32
    %2 = arith.minsi %1, %c0_i32 : i32
    %c0_i32_0 = arith.constant 0 : i32
    %c0_i32_1 = arith.constant 0 : i32
    return %2, %c0_i32_0 : i32, i32
  }
  func.func @transform_2(%arg0: i32, %arg1: i32) -> (i32, i32, i32) {
    %c0_i32 = arith.constant 0 : i32
    %c0_i32_0 = arith.constant 0 : i32
    %c0_i32_1 = arith.constant 0 : i32
    return %arg0, %c0_i32, %c0_i32_0 : i32, i32, i32
  }
}

</mosaic_0001>

<llo_original>
// kernel: set_criterion_pr.1
$region0: #{set_criterion_pr.1}
  #allocation0 [shape = 'u32[]', space=smem, size = 0x4, offset = 0x4, fixed_abs, tag = 'smem constant byte address 0x4 - core index']
  #allocation1 [shape = 'u32[72,128]{1,0:T(1,128)}', space=vmem, size = 0x9000, scoped, tag = 'internal scratch']
  #allocation2 [shape = 'f32[8,128]{1,0:T(8,128)}', space=vmem, size = 0x1000, scoped, tag = 'scratch operand']
  %s0 = inlined_call_operand.vmem [shape: f32[16,128], index: 0, kind: input, shape index: {}]
  %s1 = inlined_call_operand.vmem [shape: f32[16,128], index: 1, kind: input, shape index: {}]
  %s2 = inlined_call_operand.vmem [shape: f32[1,8,128], index: 2, kind: output, shape index: {}]
  %s3 = sld [smem:[#allocation0]]
  $region26: #{set_criterion_pr.1} parent=0
    _
  %s5 = ssub.s32 1, %s3
  %s6 = scalar_select 0, %s5, %s3
  // Predicated region
  $region2: #{set_criterion_pr.1} parent=0 // pred_check
    _
  $region3: #{set_criterion_pr.1} parent=0 // pred_check_branch
    %8 = sbr.rel (0) target = $region5
  $region4: #{set_criterion_pr.1} parent=0 // pred_region
    %s9 = sadd.s32 0, 0
    %p10 = scmp.lt.s32.totalorder %s9, 0
    %s11 = scalar_select %p10, %s9, 0
    %s12 = smul.u32 2, %s11
    %p13 = scmp.lt.s32.totalorder %s12, 1
    %s14 = scalar_select %p13, %s12, 1
    %s15 = smul.addr %s14, 8
    %s16 = scalar_lea.vmem %s0, %s15
    %s17 = sadd.s32 0, 0
    %p18 = scmp.lt.s32.totalorder %s17, 0
    %s19 = scalar_select %p18, %s17, 0
    %s20 = smul.u32 2, %s19
  $region5: #{set_criterion_pr.1} parent=0 // pred_fallthru
    _
  // Predicated region
  $region6: #{set_criterion_pr.1} parent=0 // pred_check
    _
  $region7: #{set_criterion_pr.1} parent=0 // pred_check_branch
    %22 = sbr.rel (0) target = $region9
  $region8: #{set_criterion_pr.1} parent=0 // pred_region
    %s23 = sadd.s32 0, 0
    %p24 = scmp.lt.s32.totalorder %s23, 0
    %s25 = scalar_select %p24, %s23, 0
    %s26 = smul.u32 2, %s25
    %p27 = scmp.lt.s32.totalorder %s26, 1
    %s28 = scalar_select %p27, %s26, 1
    %s29 = smul.addr %s28, 8
    %s30 = scalar_lea.vmem %s1, %s29
    %s31 = sadd.s32 0, 0
    %p32 = scmp.lt.s32.totalorder %s31, 0
    %s33 = scalar_select %p32, %s31, 0
    %s34 = smul.u32 2, %s33
  $region9: #{set_criterion_pr.1} parent=0 // pred_fallthru
    _
  %s35 = sadd.s32 0, 0
  %p36 = scmp.lt.s32.totalorder %s35, 0
  %s37 = scalar_select %p36, %s35, 0
  %s38 = smul.u32 2, %s37
  %p39 = scmp.lt.s32.totalorder %s38, 1
  %s40 = scalar_select %p39, %s38, 1
  %s41 = smul.addr %s40, 8
  %s42 = scalar_lea.vmem %s0, %s41
  %s43 = sadd.s32 0, 0
  %p44 = scmp.lt.s32.totalorder %s43, 0
  %s45 = scalar_select %p44, %s43, 0
  %s46 = smul.u32 2, %s45
  %p47 = scmp.lt.s32.totalorder %s46, 1
  %s48 = scalar_select %p47, %s46, 1
  %s49 = smul.addr %s48, 8
  %s50 = scalar_lea.vmem %s1, %s49
  %s51 = sadd.s32 0, 0
  %p52 = scmp.lt.s32.totalorder %s51, 0
  %s53 = scalar_select %p52, %s51, 0
  %s54 = smul.u32 2, %s53
  %p55 = scmp.lt.s32.totalorder %s54, 1
  %s56 = scalar_select %p55, %s54, 1
  %s57 = smul.addr %s56, 8
  %s58 = scalar_lea.vmem %s0, %s57
  %s59 = sadd.s32 0, 0
  %p60 = scmp.lt.s32.totalorder %s59, 0
  %s61 = scalar_select %p60, %s59, 0
  %s62 = smul.u32 2, %s61
  %s63 = sadd.s32 0, 0
  %p64 = scmp.lt.s32.totalorder %s63, 0
  %s65 = scalar_select %p64, %s63, 0
  %s66 = smul.u32 2, %s65
  %p67 = scmp.lt.s32.totalorder %s66, 1
  %s68 = scalar_select %p67, %s66, 1
  %s69 = smul.addr %s68, 8
  %s70 = scalar_lea.vmem %s1, %s69
  %s71 = sadd.s32 0, 0
  %p72 = scmp.lt.s32.totalorder %s71, 0
  %s73 = scalar_select %p72, %s71, 0
  %s74 = smul.u32 2, %s73
  %p75 = scmp.eq.s32.totalorder 0, 0
  // Predicated region
  $region10: #{set_criterion_pr.1} parent=0 // pred_check
    %p76 = pneg %p75
  $region11: #{set_criterion_pr.1} parent=0 // pred_check_branch
    %78 = sbr.rel (%p76) target = $region13
  $region12: #{set_criterion_pr.1} parent=0 // pred_region
    %79 = vst [vmem:[#allocation2] sm:$0xff] 0.0
  $region13: #{set_criterion_pr.1} parent=0 // pred_fallthru
    _
  %v80 = vld [vmem:[#allocation2] sm:$0xff]
  %v81 = vld [vmem:[%s58] sm:$0xff]
  %v82 = vld [vmem:[%s58 + $0x8] sm:$0xff]
  %v83 = vld [vmem:[%s70] sm:$0xff]
  %v84 = vld [vmem:[%s70 + $0x8] sm:$0xff]
  %v85 = vmul.f32 %v83, -1.0
  %v86 = vmul.f32 %v84, -1.0
  %v87 = vadd.f32 %v81, 1e-06
  %v88 = vadd.f32 %v82, 1e-06
  %v89 = vlog2.pop %v87
  %v90 = vmul.f32 %v89, 0.6931472
  %v91 = vlog2.pop %v88
  %v92 = vmul.f32 %v91, 0.6931472
  %v93 = vmul.f32 %v85, %v90
  %v94 = vmul.f32 %v86, %v92
  %v95 = vsub.f32 1.0, %v83
  %v96 = vsub.f32 1.0, %v84
  %v97 = vsub.f32 1.0, %v81
  %v98 = vsub.f32 1.0, %v82
  %v99 = vadd.f32 %v97, 1e-06
  %v100 = vadd.f32 %v98, 1e-06
  %v101 = vlog2.pop %v99
  %v102 = vmul.f32 %v101, 0.6931472
  %v103 = vlog2.pop %v100
  %v104 = vmul.f32 %v103, 0.6931472
  %v105 = vmul.f32 %v95, %v102
  %v106 = vmul.f32 %v96, %v104
  %v107 = vsub.f32 %v93, %v105
  %v108 = vsub.f32 %v94, %v106
  %v109 = vadd.f32 %v107, %v108
  %v110 = vadd.f32 %v80, %v109
  %111 = vst [vmem:[#allocation2] sm:$0xff] %v110
  // Predicated region
  $region14: #{set_criterion_pr.1} parent=0 // pred_check
    %p112 = pneg %p75
  $region15: #{set_criterion_pr.1} parent=0 // pred_check_branch
    %114 = sbr.rel (%p112) target = $region17
  $region16: #{set_criterion_pr.1} parent=0 // pred_region
    %v115 = vld [vmem:[#allocation2] sm:$0xff]
    %116 = vst [vmem:[%s2] sm:$0xff] %v115
  $region17: #{set_criterion_pr.1} parent=0 // pred_fallthru
    _
  // Predicated region
  $region18: #{set_criterion_pr.1} parent=0 // pred_check
    _
  $region19: #{set_criterion_pr.1} parent=0 // pred_check_branch
    %118 = sbr.rel (0) target = $region21
  $region20: #{set_criterion_pr.1} parent=0 // pred_region
    _
  $region21: #{set_criterion_pr.1} parent=0 // pred_fallthru
    _
  // Predicated region
  $region22: #{set_criterion_pr.1} parent=0 // pred_check
    _
  $region23: #{set_criterion_pr.1} parent=0 // pred_check_branch
    %120 = sbr.rel (0) target = $region25
  $region24: #{set_criterion_pr.1} parent=0 // pred_region
    _
  $region25: #{set_criterion_pr.1} parent=0 // pred_fallthru
    _

</llo_original>
